<compile_context>
chip_gen: v7x
topology: tpu7x:2x2x1
jax: 0.10.0
libtpu: 0.0.40
codegen_flags: <defaults>
</compile_context>

<pallas_src>
import functools

import jax
import jax.numpy as jnp
from jax import lax
from jax.experimental import pallas as pl
from jax.experimental.pallas import tpu as pltpu

HIDDEN = 64            # hidden width of the PyTorch module
LANES = 128            # TPU lane width; hidden dim zero-padded up to this
SUBLANES = 8
CHUNK = 512            # rows processed per inner step inside one batch tile
TM_MAX = 32768         # hard cap on rows per grid step


def _round_up(v, m):
    return -(-v // m) * m


def _vmem_budget_bytes():
    """Generation-aware scoped-VMEM budget: half of physical VMEM, capped at 96 MiB.

    v7x (64 MiB physical)  -> 32 MiB;   v5e/v6e (128 MiB physical) -> 64 MiB.
    Falls back to the v7x-safe 32 MiB if the hardware query is unavailable.
    """
    cap = 64 * 1024 * 1024
    try:
        info = pltpu.get_tpu_info()
        cap = int(getattr(info, "vmem_capacity_bytes", cap) or cap)
    except Exception:
        pass
    return min(cap // 2, 96 * 1024 * 1024)


def _choose_tiling(n, d, budget, block_rows=None):
    """Pick (rows per grid step, num_tiles, inner chunk) from padded VMEM footprint."""
    n8 = _round_up(max(n, 1), SUBLANES)
    # Lane/sublane-padded VMEM bytes per batch row:
    #   x tile : ceil(d/128) lane-groups * 512 B/row, double-buffered
    #   output : (1, 1, tm) f32 row ~32 B/row, double-buffered
    row_bytes = 2 * 512 * pl.cdiv(max(d, 1), LANES) + 64
    fixed = 2 * 1024 * 1024               # weights + per-chunk temporaries headroom
    tm_cap = max(SUBLANES, (max(budget * 3 // 5 - fixed, 0)) // row_bytes)
    tm_cap = min(tm_cap, TM_MAX)
    if block_rows is not None:
        tm_cap = min(tm_cap, _round_up(int(block_rows), SUBLANES))
    tm_cap = max(SUBLANES, tm_cap)

    if n8 <= tm_cap:
        # Whole batch fits one tile; split in two when big enough so both v7x cores work.
        num_tiles = 2 if n8 >= 2 * CHUNK else 1
    else:
        num_tiles = pl.cdiv(n8, tm_cap)
    tm = _round_up(pl.cdiv(n8, num_tiles), SUBLANES)
    if tm > CHUNK:
        tm = _round_up(tm, CHUNK)         # inner chunks always full -> no OOB sub-slices
    chunk = min(CHUNK, tm)
    num_tiles = pl.cdiv(n8, tm)
    return tm, num_tiles, chunk


def _attack_kernel(x_ref, w1_ref, b1_ref, w2_ref, b2_ref, o_ref, *, chunk, use_mxu):
    """One batch tile: sigmoid(relu(x@W1+b1)@W2+b2), stored as a lane-dense (1,1,tm) row."""
    n_chunks = x_ref.shape[0] // chunk    # static; tm is a multiple of chunk by construction
    w1 = w1_ref[...]                      # (d, 128) bf16 (MXU path) | (1, 128) f32 (d == 1)
    b1 = b1_ref[...]                      # (1, 128) f32
    w2 = w2_ref[...]                      # (8, 128) bf16; row 0 = real weights, rest zeros
    b2 = b2_ref[...]                      # (1, 1)   f32

    def compute(row0):
        x_c = x_ref[pl.ds(row0, chunk), :]                        # (chunk, d) f32
        if use_mxu:
            # bf16 MXU matmul, f32 accumulation (weights pre-cast in the wrapper).
            h = jnp.dot(x_c.astype(jnp.bfloat16), w1,
                        preferred_element_type=jnp.float32)       # (chunk, 128)
        else:
            # d == 1: a single VPU broadcast-multiply is cheaper than any matmul.
            h = x_c * w1                                          # (chunk, 128)
        h = jnp.maximum(h + b1, 0.0)                              # bias + ReLU (f32)

        # Layer 2: contract the hidden lanes of W2(8,128) and h(chunk,128) in bf16.
        # Result (8, chunk) is already lane-major -> lane-dense store, no masked vst.
        logits = lax.dot_general(w2, h.astype(jnp.bfloat16),
                                 (((1,), (1,)), ((), ())),
                                 preferred_element_type=jnp.float32)   # (8, chunk)
        y = jax.nn.sigmoid(logits[0:1, :] + b2)                        # (1, chunk)
        o_ref[:, :, pl.ds(row0, chunk)] = y[None].astype(o_ref.dtype)  # (1, 1, chunk)

    if n_chunks == 1:
        compute(0)
    else:
        @pl.loop(0, n_chunks)
        def _(c):
            compute(pl.multiple_of(c * chunk, chunk))


def attack_model_forward(x, w1, b1, w2, b2, *, block_rows=None):
    """Forward pass of ExampleAttackModel as a batch-tiled Pallas kernel.

    x: (N,) or (N, input_dim); w1: (input_dim, 64); b1: (64,); w2: (64, 1); b2: (1,)
    returns: (N, 1) float32 in [0, 1]
    """
    if x.ndim == 1:                       # mirrors x.unsqueeze(1) in the PyTorch model
        x = x[:, None]
    x = x.astype(jnp.float32)
    n, d = x.shape
    hidden = w1.shape[1]
    hpad = _round_up(hidden, LANES)
    use_mxu = d >= 2                      # route layer 1 through the (idle) MXU for all d >= 2

    # Weights pre-padded/pre-cast once in the wrapper (hoisted out of the kernel).
    w1_dtype = jnp.bfloat16 if use_mxu else jnp.float32
    w1p = jnp.zeros((d, hpad), w1_dtype).at[:, :hidden].set(w1.astype(w1_dtype))
    b1p = jnp.zeros((1, hpad), jnp.float32).at[:, :hidden].set(
        b1.reshape(1, hidden).astype(jnp.float32))
    w2p = jnp.zeros((SUBLANES, hpad), jnp.bfloat16).at[0, :hidden].set(
        w2.reshape(hidden).astype(jnp.bfloat16))
    b2p = b2.reshape(1, 1).astype(jnp.float32)

    budget = _vmem_budget_bytes()
    tm, num_tiles, chunk = _choose_tiling(n, d, budget, block_rows)

    kernel = functools.partial(_attack_kernel, chunk=chunk, use_mxu=use_mxu)
    cost = pl.CostEstimate(
        flops=2 * n * hpad * (d + 1),
        transcendentals=n,
        bytes_accessed=4 * (n * d + n) + 2 * hpad * (d + SUBLANES) + 4 * (hpad + 1),
    )

    out = pl.pallas_call(
        kernel,
        out_shape=jax.ShapeDtypeStruct((num_tiles, 1, tm), jnp.float32),
        grid=(num_tiles,),
        in_specs=[
            pl.BlockSpec((tm, d), lambda i: (i, 0)),           # x: tiled over batch
            pl.BlockSpec((d, hpad), lambda i: (0, 0)),         # W1 (bf16), grid-invariant
            pl.BlockSpec((1, hpad), lambda i: (0, 0)),         # b1
            pl.BlockSpec((SUBLANES, hpad), lambda i: (0, 0)),  # W2 row slab (bf16)
            pl.BlockSpec((1, 1), lambda i: (0, 0)),            # b2
        ],
        out_specs=pl.BlockSpec((1, 1, tm), lambda i: (i, 0, 0)),
        compiler_params=pltpu.CompilerParams(
            dimension_semantics=("parallel",),                 # v7x: 2 TCs split the tiles
            vmem_limit_bytes=budget,
        ),
        cost_estimate=cost,
    )(x, w1p, b1p, w2p, b2p)

    # Lane-dense (num_tiles, 1, tm) slab -> (N, 1). The tail slice is skipped when the
    # tiles exactly cover N; otherwise padded rows (>= N) are dropped here.
    flat = out.reshape(num_tiles * tm)
    if num_tiles * tm == n:
        return flat.reshape(n, 1)
    return flat[:n].reshape(n, 1)


def init_params(key, input_dim):
    """PyTorch nn.Linear default init: U(-1/sqrt(fan_in), 1/sqrt(fan_in))."""
    k1, k2, k3, k4 = jax.random.split(key, 4)
    bound1 = 1.0 / jnp.sqrt(jnp.float32(input_dim))
    bound2 = 1.0 / jnp.sqrt(jnp.float32(HIDDEN))
    w1 = jax.random.uniform(k1, (input_dim, HIDDEN), jnp.float32, -bound1, bound1)
    b1 = jax.random.uniform(k2, (HIDDEN,), jnp.float32, -bound1, bound1)
    w2 = jax.random.uniform(k3, (HIDDEN, 1), jnp.float32, -bound2, bound2)
    b2 = jax.random.uniform(k4, (1,), jnp.float32, -bound2, bound2)
    return w1, b1, w2, b2


def _reference(x, w1, b1, w2, b2, *, match_kernel=True):
    """Pure-JAX reference; match_kernel=True mirrors the kernel's bf16 matmuls."""
    if x.ndim == 1:
        x = x[:, None]
    x = x.astype(jnp.float32)
    d = x.shape[1]
    hp = lax.Precision.HIGHEST
    if match_kernel and d >= 2:
        h = jnp.dot(x.astype(jnp.bfloat16), w1.astype(jnp.bfloat16),
                    preferred_element_type=jnp.float32)
    else:
        h = jnp.dot(x, w1, preferred_element_type=jnp.float32, precision=hp)
    h = jnp.maximum(h + b1, 0.0)
    if match_kernel:
        logits = jnp.dot(h.astype(jnp.bfloat16), w2.astype(jnp.bfloat16),
                         preferred_element_type=jnp.float32) + b2
    else:
        logits = jnp.dot(h, w2, preferred_element_type=jnp.float32, precision=hp) + b2
    return jax.nn.sigmoid(logits)


if __name__ == "__main__":
    key = jax.random.PRNGKey(0)
    ks = jax.random.split(key, 6)

    # 1) Typical small case: 2-D input, input_dim=4 -> MXU layer 1, single exact tile.
    x1 = jax.random.normal(ks[0], (8, 4), jnp.float32)
    p1 = init_params(ks[1], 4)
    o1 = jax.block_until_ready(attack_model_forward(x1, *p1))
    assert o1.shape == (8, 1)
    assert bool(jnp.all((o1 >= 0.0) & (o1 <= 1.0)))
    assert jnp.allclose(o1, _reference(x1, *p1, match_kernel=True), atol=2e-3)
    assert jnp.allclose(o1, _reference(x1, *p1, match_kernel=False), atol=5e-2)

    # 2) Default module config: 1-D input (input_dim=1) -> VPU layer 1, 2 tiles on the
    #    parallel grid axis, in-tile chunk loop, ragged last tile.
    x2 = jax.random.normal(ks[2], (1500,), jnp.float32)
    p2 = init_params(ks[3], 1)
    o2 = jax.block_until_ready(attack_model_forward(x2, *p2))
    assert o2.shape == (1500, 1)
    assert jnp.allclose(o2, _reference(x2, *p2, match_kernel=True), atol=2e-3)

    # 3) Wider input_dim with forced small tiles -> several grid steps + ragged tail.
    x3 = jax.random.normal(ks[4], (200, 48), jnp.float32)
    p3 = init_params(ks[5], 48)
    o3 = jax.block_until_ready(attack_model_forward(x3, *p3, block_rows=64))
    assert o3.shape == (200, 1)
    assert jnp.allclose(o3, _reference(x3, *p3, match_kernel=True), atol=2e-3)
    assert jnp.allclose(o3, _reference(x3, *p3, match_kernel=False), atol=5e-2)

    print("KERNEL_OK")
</pallas_src>

<mosaic_0001>
module attributes {stable_mosaic.version = 11 : i64} {
  func.func @_attack_kernel(%arg0: i32, %arg1: memref<8x4xf32, #tpu.memory_space<vmem>>, %arg2: memref<4x128xbf16, #tpu.memory_space<vmem>>, %arg3: memref<1x128xf32, #tpu.memory_space<vmem>>, %arg4: memref<8x128xbf16, #tpu.memory_space<vmem>>, %arg5: memref<1x1xf32, #tpu.memory_space<vmem>>, %arg6: memref<1x1x8xf32, #tpu.memory_space<vmem>>) attributes {dimension_semantics = [#tpu.dimension_semantics<parallel>], iteration_bounds = array<i64: 1>, scalar_prefetch = 0 : i64, scratch_operands = 0 : i64, tpu.core_type = #tpu.core_type<tc>, window_params = [{transform_indices = @transform_0, window_bounds = array<i64: 8, 4>}, {pipeline_mode = #tpu.pipeline_mode<synchronous>, transform_indices = @transform_1, window_bounds = array<i64: 4, 128>}, {pipeline_mode = #tpu.pipeline_mode<synchronous>, transform_indices = @transform_2, window_bounds = array<i64: 1, 128>}, {pipeline_mode = #tpu.pipeline_mode<synchronous>, transform_indices = @transform_3, window_bounds = array<i64: 8, 128>}, {pipeline_mode = #tpu.pipeline_mode<synchronous>, transform_indices = @transform_4, window_bounds = array<i64: 1, 1>}, {transform_indices = @transform_5, window_bounds = array<i64: 1, 1, 8>}]} {
    %c0 = arith.constant 0 : index
    %c0_0 = arith.constant 0 : index
    %0 = vector.load %arg2[%c0, %c0_0] : memref<4x128xbf16, #tpu.memory_space<vmem>>, vector<4x128xbf16>
    %c0_1 = arith.constant 0 : index
    %c0_2 = arith.constant 0 : index
    %1 = vector.load %arg3[%c0_1, %c0_2] : memref<1x128xf32, #tpu.memory_space<vmem>>, vector<1x128xf32>
    %c0_3 = arith.constant 0 : index
    %c0_4 = arith.constant 0 : index
    %2 = vector.load %arg4[%c0_3, %c0_4] : memref<8x128xbf16, #tpu.memory_space<vmem>>, vector<8x128xbf16>
    %c0_5 = arith.constant 0 : index
    %c0_6 = arith.constant 0 : index
    %3 = vector.load %arg5[%c0_5, %c0_6] : memref<1x1xf32, #tpu.memory_space<vmem>>, vector<1x1xf32>
    %c0_7 = arith.constant 0 : index
    %c0_8 = arith.constant 0 : index
    %4 = vector.load %arg1[%c0_7, %c0_8] : memref<8x4xf32, #tpu.memory_space<vmem>>, vector<8x4xf32>
    %5 = arith.truncf %4 : vector<8x4xf32> to vector<8x4xbf16>
    %cst = arith.constant dense<0.000000e+00> : vector<8x128xf32>
    %6 = tpu.matmul %5, %0, %cst {dimension_numbers = #tpu.dot_dimension_numbers<[1], [0], [0], [1], [0, 0, 1, 1], [], []>} : vector<8x4xbf16>, vector<4x128xbf16>, vector<8x128xf32> -> vector<8x128xf32>
    %7 = vector.broadcast %1 : vector<1x128xf32> to vector<8x128xf32>
    %8 = arith.addf %6, %7 : vector<8x128xf32>
    %cst_9 = arith.constant 0.000000e+00 : f32
    %9 = vector.broadcast %cst_9 : f32 to vector<8x128xf32>
    %10 = arith.maximumf %8, %9 : vector<8x128xf32>
    %11 = arith.truncf %10 : vector<8x128xf32> to vector<8x128xbf16>
    %cst_10 = arith.constant dense<0.000000e+00> : vector<8x8xf32>
    %12 = tpu.matmul %2, %11, %cst_10 {dimension_numbers = #tpu.dot_dimension_numbers<[1], [1], [0], [0], [0, 0, 1, 0], [], []>} : vector<8x128xbf16>, vector<8x128xbf16>, vector<8x8xf32> -> vector<8x8xf32>
    %13 = vector.extract_strided_slice %12 {offsets = [0, 0], sizes = [1, 8], strides = [1, 1]} : vector<8x8xf32> to vector<1x8xf32>
    %14 = vector.broadcast %3 : vector<1x1xf32> to vector<1x8xf32>
    %15 = arith.addf %13, %14 : vector<1x8xf32>
    %16 = arith.negf %15 : vector<1x8xf32>
    %17 = math.exp %16 : vector<1x8xf32>
    %cst_11 = arith.constant 1.000000e+00 : f32
    %18 = vector.broadcast %cst_11 : f32 to vector<1x8xf32>
    %19 = arith.addf %18, %17 : vector<1x8xf32>
    %20 = arith.divf %18, %19 : vector<1x8xf32>
    %21 = vector.shape_cast %20 : vector<1x8xf32> to vector<1x1x8xf32>
    %c0_12 = arith.constant 0 : index
    %c0_13 = arith.constant 0 : index
    %c0_14 = arith.constant 0 : index
    %22 = vector.load %arg6[%c0_12, %c0_13, %c0_14] : memref<1x1x8xf32, #tpu.memory_space<vmem>>, vector<1x1x8xf32>
    tpu.vector_store %arg6[%c0_12, %c0_13, %c0_14], %21 {strides = array<i32>} : memref<1x1x8xf32, #tpu.memory_space<vmem>>, vector<1x1x8xf32>,
    return
  }
  func.func @transform_0(%arg0: i32) -> (i32, i32) {
    %c0_i32 = arith.constant 0 : i32
    %c0_i32_0 = arith.constant 0 : i32
    return %arg0, %c0_i32 : i32, i32
  }
  func.func @transform_1(%arg0: i32) -> (i32, i32) {
    %c0_i32 = arith.constant 0 : i32
    %c0_i32_0 = arith.constant 0 : i32
    %c0_i32_1 = arith.constant 0 : i32
    return %c0_i32, %c0_i32_0 : i32, i32
  }
  func.func @transform_2(%arg0: i32) -> (i32, i32) {
    %c0_i32 = arith.constant 0 : i32
    %c0_i32_0 = arith.constant 0 : i32
    %c0_i32_1 = arith.constant 0 : i32
    return %c0_i32, %c0_i32_0 : i32, i32
  }
  func.func @transform_3(%arg0: i32) -> (i32, i32) {
    %c0_i32 = arith.constant 0 : i32
    %c0_i32_0 = arith.constant 0 : i32
    %c0_i32_1 = arith.constant 0 : i32
    return %c0_i32, %c0_i32_0 : i32, i32
  }
  func.func @transform_4(%arg0: i32) -> (i32, i32) {
    %c0_i32 = arith.constant 0 : i32
    %c0_i32_0 = arith.constant 0 : i32
    %c0_i32_1 = arith.constant 0 : i32
    return %c0_i32, %c0_i32_0 : i32, i32
  }
  func.func @transform_5(%arg0: i32) -> (i32, i32, i32) {
    %c0_i32 = arith.constant 0 : i32
    %c0_i32_0 = arith.constant 0 : i32
    %c0_i32_1 = arith.constant 0 : i32
    return %arg0, %c0_i32, %c0_i32_0 : i32, i32, i32
  }
}

</mosaic_0001>

<llo_original>
// kernel: tpu_custom_call.1
$region0: #{tpu_custom_call.1}
  #allocation0 [shape = 'u32[]', space=smem, size = 0x4, offset = 0x4, fixed_abs, tag = 'smem constant byte address 0x4 - core index']
  #allocation1 [shape = 'u32[144,128]{1,0:T(1,128)}', space=vmem, size = 0x12000, scoped, tag = 'internal scratch']
  #allocation2 [shape = 'f32[1,1]{1,0:T(1,128)S(1)}', space=vmem, size = 0x200, scoped, tag = 'scoped memory for tpu_custom_call.1']
  %s0 = inlined_call_operand.vmem [shape: f32[8,4], index: 0, kind: input, shape index: {}]
  %s1 = inlined_call_operand.vmem [shape: bf16[4,128], index: 1, kind: input, shape index: {}]
  %s2 = inlined_call_operand.vmem [shape: f32[1,128], index: 2, kind: input, shape index: {}]
  %s3 = inlined_call_operand.vmem [shape: bf16[8,128], index: 3, kind: input, shape index: {}]
  %s4 = inlined_call_operand.<no memory space> [shape: f32[1,1], index: 4, kind: input, shape index: {}]
  %s5 = inlined_call_operand.hbm [shape: f32[1,1,8], index: 5, kind: output, shape index: {}]
  %s6 = sld [smem:[#allocation0]]
  $region30: #{tpu_custom_call.1} parent=0
    _
  %s8 = ssub.s32 1, %s6
  %s9 = scalar_select 0, %s8, %s6
  %v10 = vstv %s4
  %11 = vst [vmem:[#allocation2] sm:$0x1] %v10
  $region1: #{tpu_custom_call.1} parent=0
    #allocation3 [shape = 'u8[512]{0}', space=vmem, size = 0x400, scoped, tag = 'output window, operand 0, single buffered']
    #allocation4 [shape = 's32[1]{0}', space=sflag, size = 0x4, scoped, tag = 'scoped memory for tpu_custom_call.1']
    %12 = vsyncpa [#allocation4], 0
    // Predicated region
    $region2: #{tpu_custom_call.1} parent=1 // pred_check
      _
    $region3: #{tpu_custom_call.1} parent=1 // pred_check_branch
      %14 = sbr.rel (0) target = $region5
    $region4: #{tpu_custom_call.1} parent=1 // pred_region
      _
    $region5: #{tpu_custom_call.1} parent=1 // pred_fallthru
      _
    // Predicated region
    $region6: #{tpu_custom_call.1} parent=1 // pred_check
      _
    $region7: #{tpu_custom_call.1} parent=1 // pred_check_branch
      %16 = sbr.rel (0) target = $region9
    $region8: #{tpu_custom_call.1} parent=1 // pred_region
      _
    $region9: #{tpu_custom_call.1} parent=1 // pred_fallthru
      _
    // Predicated region
    $region10: #{tpu_custom_call.1} parent=1 // pred_check
      _
    $region11: #{tpu_custom_call.1} parent=1 // pred_check_branch
      %18 = sbr.rel (0) target = $region13
    $region12: #{tpu_custom_call.1} parent=1 // pred_region
      _
    $region13: #{tpu_custom_call.1} parent=1 // pred_fallthru
      _
    // Predicated region
    $region14: #{tpu_custom_call.1} parent=1 // pred_check
      _
    $region15: #{tpu_custom_call.1} parent=1 // pred_check_branch
      %20 = sbr.rel (0) target = $region17
    $region16: #{tpu_custom_call.1} parent=1 // pred_region
      _
    $region17: #{tpu_custom_call.1} parent=1 // pred_fallthru
      _
    // Predicated region
    $region18: #{tpu_custom_call.1} parent=1 // pred_check
      _
    $region19: #{tpu_custom_call.1} parent=1 // pred_check_branch
      %22 = sbr.rel (0) target = $region21
    $region20: #{tpu_custom_call.1} parent=1 // pred_region
      _
    $region21: #{tpu_custom_call.1} parent=1 // pred_fallthru
      _
    %v24 = vld [vmem:[%s1] sm:$0x3]
    %v25 = vld [vmem:[%s2] sm:$0x1]
    %v26 = vld [vmem:[%s3] sm:$0xf]
    %v27 = vld [vmem:[#allocation2] sm:$0x1]
    %v28 = vld [vmem:[%s0] sm:$0xff]
    %v29 = vpack.c.bf16 %v28, %v28
    %v31 = vlaneseq
    %v32 = vshrl.u32 %v31, 7
    %v33 = vsub.s32 0, %v32
    %v34 = vrot.slane %v25, %v33
    %vm36 = vcmask 31744
    %v38 = vsel %vm36, %v29, 0
    %vm40 = vcmask 1041408
    %v42 = vsel %vm40, %v24, 0
    %44 = vmatprep.subr.bf16.mxu0 0
    %45 = vmatpush1.bf16.msra.mxu0 %v42
    %46 = vmatprep.subr.bf16.mxu0 0
    %47 = vmatpush1.bf16.msra.mxu0 0
    %48 = vmatprep.subr.bf16.mxu0 0
    %49 = vmatpush1.bf16.msra.mxu0 0
    %50 = vmatprep.subr.bf16.mxu0 0
    %51 = vmatpush1.bf16.msra.mxu0 0
    %52 = vmatprep.subr.bf16.mxu0 0
    %53 = vmatpush1.bf16.msra.mxu0 0
    %54 = vmatprep.subr.bf16.mxu0 0
    %55 = vmatpush1.bf16.msra.mxu0 0
    %56 = vmatprep.subr.bf16.mxu0 0
    %57 = vmatpush1.bf16.msra.mxu0 0
    %58 = vmatprep.subr.bf16.mxu0 0
    %59 = vmatpush1.bf16.msra.mxu0 0
    %60 = vmatprep.subr.bf16.mxu0 0
    %61 = vmatpush1.bf16.msra.mxu0 0
    %62 = vmatprep.subr.bf16.mxu0 0
    %63 = vmatpush1.bf16.msra.mxu0 0
    %64 = vmatprep.subr.bf16.mxu0 0
    %65 = vmatpush1.bf16.msra.mxu0 0
    %66 = vmatprep.subr.bf16.mxu0 0
    %67 = vmatpush1.bf16.msra.mxu0 0
    %68 = vmatprep.subr.bf16.mxu0 0
    %69 = vmatpush1.bf16.msra.mxu0 0
    %70 = vmatprep.subr.bf16.mxu0 0
    %71 = vmatpush1.bf16.msra.mxu0 0
    %72 = vmatprep.subr.bf16.mxu0 0
    %73 = vmatpush1.bf16.msra.mxu0 0
    %74 = vmatprep.subr.bf16.mxu0 0
    %75 = vmatpush1.bf16.msra.mxu0 0
    %76 = vmatprep.mubr.bf16.mxu0 0
    %77 = vmatmul.mubr.bf16.gmra.mrb[0].mxu0 %v38
    %v78 = vpop.f32.mrb[0].mxu0
    %v79 = vadd.f32 %v34, %v78
    %v80 = vpop.f32.mrb[0].mxu0
    %v81 = vpop.f32.mrb[0].mxu0
    %v82 = vpop.f32.mrb[0].mxu0
    %83 = vdwg.mxu0
    %v84 = vmax.f32 %v79, 0.0
    %v85 = vpack.c.bf16 %v84, %v84
    %86 = vmatprep.subr.bf16.mxu0 0
    %87 = vmatpush1.bf16.xpose.msra.mxu0 %v85
    %88 = vmatprep.subr.bf16.mxu0 0
    %89 = vmatpush1.bf16.xpose.msra.mxu0 0
    %90 = vmatprep.subr.bf16.mxu0 0
    %91 = vmatpush1.bf16.xpose.msra.mxu0 0
    %92 = vmatprep.subr.bf16.mxu0 0
    %93 = vmatpush1.bf16.xpose.msra.mxu0 0
    %94 = vmatprep.subr.bf16.mxu0 0
    %95 = vmatpush1.bf16.xpose.msra.mxu0 0
    %96 = vmatprep.subr.bf16.mxu0 0
    %97 = vmatpush1.bf16.xpose.msra.mxu0 0
    %98 = vmatprep.subr.bf16.mxu0 0
    %99 = vmatpush1.bf16.xpose.msra.mxu0 0
    %100 = vmatprep.subr.bf16.mxu0 0
    %101 = vmatpush1.bf16.xpose.msra.mxu0 0
    %102 = vmatprep.subr.bf16.mxu0 0
    %103 = vmatpush1.bf16.xpose.msra.mxu0 0
    %104 = vmatprep.subr.bf16.mxu0 0
    %105 = vmatpush1.bf16.xpose.msra.mxu0 0
    %106 = vmatprep.subr.bf16.mxu0 0
    %107 = vmatpush1.bf16.xpose.msra.mxu0 0
    %108 = vmatprep.subr.bf16.mxu0 0
    %109 = vmatpush1.bf16.xpose.msra.mxu0 0
    %110 = vmatprep.subr.bf16.mxu0 0
    %111 = vmatpush1.bf16.xpose.msra.mxu0 0
    %112 = vmatprep.subr.bf16.mxu0 0
    %113 = vmatpush1.bf16.xpose.msra.mxu0 0
    %114 = vmatprep.subr.bf16.mxu0 0
    %115 = vmatpush1.bf16.xpose.msra.mxu0 0
    %116 = vmatprep.subr.bf16.mxu0 0
    %117 = vmatpush1.bf16.xpose.msra.mxu0 0
    %118 = vmatprep.mubr.bf16.mxu0 0
    %119 = vmatmul.mubr.bf16.gmra.mrb[0].mxu0 %v26
    %v120 = vpop.f32.mrb[0].mxu0
    %v121 = vadd.f32 0.0, %v120
    %v122 = vpop.f32.mrb[0].mxu0
    %v123 = vpop.f32.mrb[0].mxu0
    %v124 = vpop.f32.mrb[0].mxu0
    %125 = vdwg.mxu0
    %127 = vset.pattern.permute.xlu0 0
    %128 = vperm.xlu0 %127, %v27
    %v129 = vpop.permute.xlu0 %128
    %v131 = vlaneseq
    %v132 = vshrl.u32 %v131, 7
    %v133 = vsub.s32 0, %v132
    %v134 = vrot.slane %v129, %v133
    %v135 = vadd.f32 %v121, %v134
    %v136 = vxor.u32 %v135, 2147483648
    %v137 = vmul.f32 %v136, 1.442695
    %v138 = vpow.pop %v137
    %v139 = vadd.f32 %v138, 1.0
    %v140 = vrcp.pop %v139
    %v141 = vmul.f32 1.0, %v140
    %vm142 = vcmask 57344
    %143 = vst.msk [vmem:[#allocation3] sm:$0x1] %vm142, %v141
    // Predicated region
    $region22: #{tpu_custom_call.1} parent=1 // pred_check
      _
    $region23: #{tpu_custom_call.1} parent=1 // pred_check_branch
      %145 = sbr.rel (0) target = $region25
    $region24: #{tpu_custom_call.1} parent=1 // pred_region
      %s147 = ssub.s32 16, 16
      %148 = vsyncadd [#allocation4], %s147
      %s150 = sshll.u32 [#allocation3], 4
      %s151 = int_to_ptr.vmem [resolvable:$true] %s150
      %153 = dma.vmem_to_hbm [thread:$0]  %s151, 16, %s5, [#allocation4]
    $region25: #{tpu_custom_call.1} parent=1 // pred_fallthru
      _
    // Predicated region
    $region26: #{tpu_custom_call.1} parent=1 // pred_check
      _
    $region27: #{tpu_custom_call.1} parent=1 // pred_check_branch
      %155 = sbr.rel (0) target = $region29
    $region28: #{tpu_custom_call.1} parent=1 // pred_region
      %156 = dma.done [#allocation4], 16
    $region29: #{tpu_custom_call.1} parent=1 // pred_fallthru
      _
    %157 = vsyncpa [#allocation4], 1

</llo_original>
